<compile_context>
chip_gen: v5e
topology: v5e:2x2
jax: 0.10.0
libtpu: 0.0.40
codegen_flags: <defaults>
</compile_context>

<pallas_src>
import math
import functools

import jax
import jax.numpy as jnp
from jax.experimental import pallas as pl
from jax.experimental.pallas import tpu as pltpu

# Sized for the smallest generation's budget (v7x: 64 MiB physical / 32 MiB
# scoped default).  Re-derive if tile constants below are enlarged.
VMEM_LIMIT = 32 * 1024 * 1024

_M_TILES = (256, 128, 64, 32, 16, 8)   # row (sublane) tiles
_N_TILES = (512, 256, 128)             # lane tiles, MXU-aligned (256 on v6e/v7x)


def _pick_tile(dim, preferred):
    """Largest MXU-friendly tile that divides `dim`, else the full dim."""
    for t in preferred:
        if t <= dim and dim % t == 0:
            return t
    return dim


# ----------------------------- Pallas kernels ------------------------------

def _ln_linear_kernel(x_ref, g_ref, bln_ref, w_ref, b_ref, o_ref, *, gelu):
    # f32 LayerNorm -> bf16 MXU matmul -> f32 bias (+ tanh GELU) epilogue.
    x = x_ref[...]                                           # (tm, K) f32
    mean = jnp.mean(x, axis=-1, keepdims=True)
    var = jnp.mean(jnp.square(x - mean), axis=-1, keepdims=True)  # biased var
    xn = (x - mean) * jax.lax.rsqrt(var + 1e-5) * g_ref[...] + bln_ref[...]
    h = jnp.dot(xn.astype(jnp.bfloat16), w_ref[...],
                preferred_element_type=jnp.float32) + b_ref[...]
    if gelu:  # GELU tanh approximation (matches nn.GELU(approximate='tanh'))
        c = math.sqrt(2.0 / math.pi)
        h = 0.5 * h * (1.0 + jnp.tanh(c * (h + 0.044715 * h * h * h)))
    o_ref[...] = h.astype(o_ref.dtype)


def _linear_residual_kernel(x_ref, w_ref, b_ref, r_ref, o_ref):
    # bf16 MXU matmul -> f32 bias + residual-add epilogue.
    h = jnp.dot(x_ref[...], w_ref[...], preferred_element_type=jnp.float32)
    o_ref[...] = (r_ref[...] + h + b_ref[...]).astype(o_ref.dtype)


def _ln_lm_head_kernel(x_ref, g_ref, bln_ref, w_ref, o_ref):
    # Final LayerNorm fused with the (tied) lm_head matmul.  The embedding
    # table tile is used as-is ([tn, C]) by contracting on its second dim, so
    # wte.T is never materialized in HBM.
    x = x_ref[...]
    mean = jnp.mean(x, axis=-1, keepdims=True)
    var = jnp.mean(jnp.square(x - mean), axis=-1, keepdims=True)
    xn = (x - mean) * jax.lax.rsqrt(var + 1e-5) * g_ref[...] + bln_ref[...]
    o_ref[...] = jax.lax.dot_general(
        xn.astype(jnp.bfloat16), w_ref[...],
        dimension_numbers=(((1,), (1,)), ((), ())),
        preferred_element_type=jnp.float32)


def _causal_attn_kernel(qkv_ref, o_ref, *, n_head, scale):
    # qkv_ref: (1, T, 3C) bf16 for one batch element; o_ref: (1, T, C) bf16.
    # Heads are a static unrolled loop; all per-head slices are static and the
    # output is a single lane-dense (T, C) store.
    # TODO(synk): for long T, switch to a flash-style KV-tiled online softmax
    # that skips KV blocks above the causal diagonal.
    T = qkv_ref.shape[1]
    C = o_ref.shape[2]
    hs = C // n_head
    qkv = qkv_ref[0]                                         # (T, 3C) bf16
    row = jax.lax.broadcasted_iota(jnp.int32, (T, T), 0)
    col = jax.lax.broadcasted_iota(jnp.int32, (T, T), 1)
    causal = row >= col
    outs = []
    for h in range(n_head):
        q = qkv[:, h * hs:(h + 1) * hs]
        k = qkv[:, C + h * hs:C + (h + 1) * hs]
        v = qkv[:, 2 * C + h * hs:2 * C + (h + 1) * hs]
        s = jax.lax.dot_general(                             # q @ k.T (MXU)
            q, k, dimension_numbers=(((1,), (1,)), ((), ())),
            preferred_element_type=jnp.float32) * scale      # (T, T) f32
        s = jnp.where(causal, s, -jnp.inf)
        m = jnp.max(s, axis=-1, keepdims=True)
        p = jnp.exp(s - m)
        l = jnp.sum(p, axis=-1, keepdims=True)
        acc = jnp.dot(p.astype(jnp.bfloat16), v,
                      preferred_element_type=jnp.float32)    # (T, hs) f32
        # normalize the small accumulator (EUP reciprocal), not the TxT probs
        outs.append((acc * pl.reciprocal(l, approx=True)).astype(o_ref.dtype))
    o_ref[0] = jnp.concatenate(outs, axis=-1)                # lane-dense store


# ------------------------------ kernel wrappers ----------------------------

def ln_linear(x2d, g, bln, w_bf16, b, *, gelu=False, out_dtype=jnp.bfloat16):
    M, K = x2d.shape
    N = w_bf16.shape[1]
    tm = _pick_tile(M, _M_TILES)
    tn = _pick_tile(N, _N_TILES)
    grid = (N // tn, M // tm)          # N outer, M inner: weight tile resident
    out_bytes = jnp.dtype(out_dtype).itemsize
    cost = pl.CostEstimate(
        flops=2 * M * K * N,
        transcendentals=(M * N if gelu else 0) + M,
        bytes_accessed=(N // tn) * M * K * 4 + K * N * 2 + M * N * out_bytes)
    return pl.pallas_call(
        functools.partial(_ln_linear_kernel, gelu=gelu),
        out_shape=jax.ShapeDtypeStruct((M, N), out_dtype),
        grid=grid,
        in_specs=[
            pl.BlockSpec((tm, K), lambda j, i: (i, 0)),   # full K per row tile
            pl.BlockSpec((1, K), lambda j, i: (0, 0)),
            pl.BlockSpec((1, K), lambda j, i: (0, 0)),
            pl.BlockSpec((K, tn), lambda j, i: (0, j)),   # resident across i
            pl.BlockSpec((1, tn), lambda j, i: (0, j)),
        ],
        out_specs=pl.BlockSpec((tm, tn), lambda j, i: (i, j)),
        compiler_params=pltpu.CompilerParams(
            dimension_semantics=("parallel", "parallel"),
            vmem_limit_bytes=VMEM_LIMIT),
        cost_estimate=cost,
    )(x2d, g.reshape(1, K), bln.reshape(1, K), w_bf16, b.reshape(1, N))


def linear_residual(x2d_bf16, w_bf16, b, residual_f32):
    M, K = x2d_bf16.shape
    N = w_bf16.shape[1]
    tm = _pick_tile(M, _M_TILES)
    tn = _pick_tile(N, _N_TILES)
    grid = (N // tn, M // tm)
    cost = pl.CostEstimate(
        flops=2 * M * K * N, transcendentals=0,
        bytes_accessed=(N // tn) * M * K * 2 + K * N * 2 + 2 * M * N * 4)
    return pl.pallas_call(
        _linear_residual_kernel,
        out_shape=jax.ShapeDtypeStruct((M, N), jnp.float32),
        grid=grid,
        in_specs=[
            pl.BlockSpec((tm, K), lambda j, i: (i, 0)),
            pl.BlockSpec((K, tn), lambda j, i: (0, j)),
            pl.BlockSpec((1, tn), lambda j, i: (0, j)),
            pl.BlockSpec((tm, tn), lambda j, i: (i, j)),  # residual tile
        ],
        out_specs=pl.BlockSpec((tm, tn), lambda j, i: (i, j)),
        compiler_params=pltpu.CompilerParams(
            dimension_semantics=("parallel", "parallel"),
            vmem_limit_bytes=VMEM_LIMIT),
        cost_estimate=cost,
    )(x2d_bf16, w_bf16, b.reshape(1, N), residual_f32)


def ln_lm_head(x2d, g, bln, wte_bf16, vocab_size):
    M, K = x2d.shape
    Vp = wte_bf16.shape[0]                       # padded vocab
    tm = _pick_tile(M, _M_TILES)
    tn = _pick_tile(Vp, _N_TILES)
    grid = (Vp // tn, M // tm)
    cost = pl.CostEstimate(
        flops=2 * M * K * Vp, transcendentals=M,
        bytes_accessed=(Vp // tn) * M * K * 4 + Vp * K * 2 + M * Vp * 4)
    logits = pl.pallas_call(
        _ln_lm_head_kernel,
        out_shape=jax.ShapeDtypeStruct((M, Vp), jnp.float32),
        grid=grid,
        in_specs=[
            pl.BlockSpec((tm, K), lambda j, i: (i, 0)),
            pl.BlockSpec((1, K), lambda j, i: (0, 0)),
            pl.BlockSpec((1, K), lambda j, i: (0, 0)),
            pl.BlockSpec((tn, K), lambda j, i: (j, 0)),  # wte used untransposed
        ],
        out_specs=pl.BlockSpec((tm, tn), lambda j, i: (i, j)),
        compiler_params=pltpu.CompilerParams(
            dimension_semantics=("parallel", "parallel"),
            vmem_limit_bytes=VMEM_LIMIT),
        cost_estimate=cost,
    )(x2d, g.reshape(1, K), bln.reshape(1, K), wte_bf16)
    return logits[:, :vocab_size] if Vp != vocab_size else logits


def causal_attention(qkv_btc, n_head, n_embd):
    B, T, threeC = qkv_btc.shape
    C = n_embd
    hs = C // n_head
    scale = 1.0 / math.sqrt(hs)
    cost = pl.CostEstimate(
        flops=4 * B * n_head * T * T * hs,
        transcendentals=B * n_head * T * T,
        bytes_accessed=B * T * threeC * 2 + B * T * C * 2)
    return pl.pallas_call(
        functools.partial(_causal_attn_kernel, n_head=n_head, scale=scale),
        out_shape=jax.ShapeDtypeStruct((B, T, C), jnp.bfloat16),
        grid=(B,),
        in_specs=[pl.BlockSpec((1, T, threeC), lambda b: (b, 0, 0))],
        out_specs=pl.BlockSpec((1, T, C), lambda b: (b, 0, 0)),
        compiler_params=pltpu.CompilerParams(
            dimension_semantics=("parallel",),
            vmem_limit_bytes=VMEM_LIMIT),
        cost_estimate=cost,
    )(qkv_btc)


# --------------------------------- model -----------------------------------

def init_params(key, *, vocab_size, block_size, n_layer, n_head, n_embd):
    C = n_embd
    std = 0.02
    proj_std = (2 * n_layer) ** (-0.5)   # FLAG_SCALING_SQRT on attn.c_proj
    keys = iter(jax.random.split(key, 4 + 6 * n_layer))

    def nrm(k, shape, s):
        return s * jax.random.normal(k, shape, jnp.float32)

    params = {
        "wte": nrm(next(keys), (vocab_size, C), std),
        "wpe": nrm(next(keys), (block_size, C), std),
        "ln_f_g": jnp.ones((C,), jnp.float32),
        "ln_f_b": jnp.zeros((C,), jnp.float32),
        "n_head": n_head,
        "blocks": [],
    }
    for _ in range(n_layer):
        blk = {
            "ln1_g": jnp.ones((C,), jnp.float32),
            "ln1_b": jnp.zeros((C,), jnp.float32),
            "attn_w": nrm(next(keys), (C, 3 * C), std),    # stored [in, out]
            "attn_b": jnp.zeros((3 * C,), jnp.float32),
            "proj_w": nrm(next(keys), (C, C), proj_std),
            "proj_b": jnp.zeros((C,), jnp.float32),
            "ln2_g": jnp.ones((C,), jnp.float32),
            "ln2_b": jnp.zeros((C,), jnp.float32),
            "fc_w": nrm(next(keys), (C, 4 * C), std),
            "fc_b": jnp.zeros((4 * C,), jnp.float32),
            "mlp_proj_w": nrm(next(keys), (4 * C, C), std),
            "mlp_proj_b": jnp.zeros((C,), jnp.float32),
        }
        params["blocks"].append(blk)
    # lm_head weight is tied to wte (weight tying), so no separate param.
    return params


def prepare_params(params):
    """One-time prep: cast matmul weights to bf16 (MXU inputs) and pad the
    tied lm_head table so the vocab axis tiles cleanly (multiple of 128)."""
    V, C = params["wte"].shape
    Vp = ((V + 127) // 128) * 128
    wte_lm = params["wte"].astype(jnp.bfloat16)
    if Vp != V:
        wte_lm = jnp.pad(wte_lm, ((0, Vp - V), (0, 0)))
    prep = {
        "wte": params["wte"],          # f32, for the embedding gather
        "wpe": params["wpe"],
        "wte_lm": wte_lm,              # bf16, padded, lm_head weight
        "vocab_size": V,
        "ln_f_g": params["ln_f_g"],
        "ln_f_b": params["ln_f_b"],
        "n_head": params["n_head"],
        "blocks": [],
    }
    for blk in params["blocks"]:
        b = dict(blk)
        for w in ("attn_w", "proj_w", "fc_w", "mlp_proj_w"):
            b[w] = blk[w].astype(jnp.bfloat16)
        prep["blocks"].append(b)
    return prep


def block_forward(p, x, n_head):
    B, T, C = x.shape
    x2 = x.reshape(B * T, C)                     # f32 residual stream

    # --- attention sub-block: LN1 fused into qkv matmul, residual fused into
    # c_proj; attention reads qkv directly, no head transposes in JAX.
    qkv = ln_linear(x2, p["ln1_g"], p["ln1_b"], p["attn_w"], p["attn_b"])
    y = causal_attention(qkv.reshape(B, T, 3 * C), n_head, C)      # (B,T,C) bf16
    x2 = linear_residual(y.reshape(B * T, C), p["proj_w"], p["proj_b"], x2)

    # --- MLP sub-block: LN2 + bias + GELU fused into c_fc, residual fused
    # into mlp c_proj.
    h = ln_linear(x2, p["ln2_g"], p["ln2_b"], p["fc_w"], p["fc_b"], gelu=True)
    x2 = linear_residual(h, p["mlp_proj_w"], p["mlp_proj_b"], x2)
    return x2.reshape(B, T, C)


def gpt_forward(params, idx):
    B, T = idx.shape
    C = params["wte"].shape[1]
    tok_embd = params["wte"][idx]                # gather is glue, plain JAX
    pos_embd = params["wpe"][:T]
    x = tok_embd + pos_embd[None, :, :]
    for blk in params["blocks"]:
        x = block_forward(blk, x, params["n_head"])
    logits = ln_lm_head(x.reshape(B * T, C), params["ln_f_g"],
                        params["ln_f_b"], params["wte_lm"],
                        params["vocab_size"])
    return logits.reshape(B, T, -1)
    # TODO(synk): cross-entropy loss (targets path) not implemented; forward
    # matches the `targets=None` branch.


# ---------------------------------- main ------------------------------------

if __name__ == "__main__":
    cfg = dict(vocab_size=128, block_size=16, n_layer=2, n_head=4, n_embd=32)
    B, T = 2, 8

    key = jax.random.PRNGKey(0)
    pkey, ikey = jax.random.split(key)
    params = prepare_params(init_params(pkey, **cfg))
    idx = jax.random.randint(ikey, (B, T), 0, cfg["vocab_size"], dtype=jnp.int32)

    logits = gpt_forward(params, idx)
    jax.block_until_ready(logits)
    assert logits.shape == (B, T, cfg["vocab_size"])
    assert logits.dtype == jnp.float32
    print("KERNEL_OK")
</pallas_src>

<mosaic_0001>
module attributes {stable_mosaic.version = 11 : i64} {
  func.func @_ln_linear_kernel(%arg0: i32, %arg1: i32, %arg2: memref<16x32xf32, #tpu.memory_space<vmem>>, %arg3: memref<1x32xf32, #tpu.memory_space<vmem>>, %arg4: memref<1x32xf32, #tpu.memory_space<vmem>>, %arg5: memref<32x96xbf16, #tpu.memory_space<vmem>>, %arg6: memref<1x96xf32, #tpu.memory_space<vmem>>, %arg7: memref<16x96xbf16, #tpu.memory_space<vmem>>) attributes {dimension_semantics = [#tpu.dimension_semantics<parallel>, #tpu.dimension_semantics<parallel>], iteration_bounds = array<i64: 1, 1>, scalar_prefetch = 0 : i64, scratch_operands = 0 : i64, tpu.core_type = #tpu.core_type<tc>, window_params = [{transform_indices = @transform_0, window_bounds = array<i64: 16, 32>}, {pipeline_mode = #tpu.pipeline_mode<synchronous>, transform_indices = @transform_1, window_bounds = array<i64: 1, 32>}, {pipeline_mode = #tpu.pipeline_mode<synchronous>, transform_indices = @transform_2, window_bounds = array<i64: 1, 32>}, {transform_indices = @transform_3, window_bounds = array<i64: 32, 96>}, {transform_indices = @transform_4, window_bounds = array<i64: 1, 96>}, {transform_indices = @transform_5, window_bounds = array<i64: 16, 96>}]} {
    %c0 = arith.constant 0 : index
    %c0_0 = arith.constant 0 : index
    %0 = vector.load %arg2[%c0, %c0_0] : memref<16x32xf32, #tpu.memory_space<vmem>>, vector<16x32xf32>
    %cst = arith.constant dense<0.000000e+00> : vector<16xf32>
    %1 = vector.multi_reduction <add>, %0, %cst [1] : vector<16x32xf32> to vector<16xf32>
    %2 = vector.shape_cast %1 : vector<16xf32> to vector<16x1xf32>
    %cst_1 = arith.constant 3.200000e+01 : f32
    %3 = vector.broadcast %cst_1 : f32 to vector<16x1xf32>
    %4 = arith.divf %2, %3 : vector<16x1xf32>
    %5 = vector.broadcast %4 : vector<16x1xf32> to vector<16x32xf32>
    %6 = arith.subf %0, %5 : vector<16x32xf32>
    %7 = arith.mulf %6, %6 : vector<16x32xf32>
    %cst_2 = arith.constant dense<0.000000e+00> : vector<16xf32>
    %8 = vector.multi_reduction <add>, %7, %cst_2 [1] : vector<16x32xf32> to vector<16xf32>
    %9 = vector.shape_cast %8 : vector<16xf32> to vector<16x1xf32>
    %cst_3 = arith.constant 3.200000e+01 : f32
    %10 = vector.broadcast %cst_3 : f32 to vector<16x1xf32>
    %11 = arith.divf %9, %10 : vector<16x1xf32>
    %12 = vector.broadcast %4 : vector<16x1xf32> to vector<16x32xf32>
    %13 = arith.subf %0, %12 : vector<16x32xf32>
    %cst_4 = arith.constant 9.99999974E-6 : f32
    %14 = vector.broadcast %cst_4 : f32 to vector<16x1xf32>
    %15 = arith.addf %11, %14 : vector<16x1xf32>
    %16 = math.rsqrt %15 : vector<16x1xf32>
    %17 = vector.broadcast %16 : vector<16x1xf32> to vector<16x32xf32>
    %18 = arith.mulf %13, %17 : vector<16x32xf32>
    %c0_5 = arith.constant 0 : index
    %c0_6 = arith.constant 0 : index
    %19 = vector.load %arg3[%c0_5, %c0_6] : memref<1x32xf32, #tpu.memory_space<vmem>>, vector<1x32xf32>
    %20 = vector.broadcast %19 : vector<1x32xf32> to vector<16x32xf32>
    %21 = arith.mulf %18, %20 : vector<16x32xf32>
    %c0_7 = arith.constant 0 : index
    %c0_8 = arith.constant 0 : index
    %22 = vector.load %arg4[%c0_7, %c0_8] : memref<1x32xf32, #tpu.memory_space<vmem>>, vector<1x32xf32>
    %23 = vector.broadcast %22 : vector<1x32xf32> to vector<16x32xf32>
    %24 = arith.addf %21, %23 : vector<16x32xf32>
    %25 = arith.truncf %24 : vector<16x32xf32> to vector<16x32xbf16>
    %c0_9 = arith.constant 0 : index
    %c0_10 = arith.constant 0 : index
    %26 = vector.load %arg5[%c0_9, %c0_10] : memref<32x96xbf16, #tpu.memory_space<vmem>>, vector<32x96xbf16>
    %cst_11 = arith.constant dense<0.000000e+00> : vector<16x96xf32>
    %27 = tpu.matmul %25, %26, %cst_11 {dimension_numbers = #tpu.dot_dimension_numbers<[1], [0], [0], [1], [0, 0, 1, 1], [], []>} : vector<16x32xbf16>, vector<32x96xbf16>, vector<16x96xf32> -> vector<16x96xf32>
    %c0_12 = arith.constant 0 : index
    %c0_13 = arith.constant 0 : index
    %28 = vector.load %arg6[%c0_12, %c0_13] : memref<1x96xf32, #tpu.memory_space<vmem>>, vector<1x96xf32>
    %29 = vector.broadcast %28 : vector<1x96xf32> to vector<16x96xf32>
    %30 = arith.addf %27, %29 : vector<16x96xf32>
    %31 = arith.truncf %30 : vector<16x96xf32> to vector<16x96xbf16>
    %c0_14 = arith.constant 0 : index
    %c0_15 = arith.constant 0 : index
    %32 = vector.load %arg7[%c0_14, %c0_15] : memref<16x96xbf16, #tpu.memory_space<vmem>>, vector<16x96xbf16>
    tpu.vector_store %arg7[%c0_14, %c0_15], %31 {strides = array<i32>} : memref<16x96xbf16, #tpu.memory_space<vmem>>, vector<16x96xbf16>,
    return
  }
  func.func @transform_0(%arg0: i32, %arg1: i32) -> (i32, i32) {
    %c0_i32 = arith.constant 0 : i32
    %c0_i32_0 = arith.constant 0 : i32
    return %arg1, %c0_i32 : i32, i32
  }
  func.func @transform_1(%arg0: i32, %arg1: i32) -> (i32, i32) {
    %c0_i32 = arith.constant 0 : i32
    %c0_i32_0 = arith.constant 0 : i32
    %c0_i32_1 = arith.constant 0 : i32
    return %c0_i32, %c0_i32_0 : i32, i32
  }
  func.func @transform_2(%arg0: i32, %arg1: i32) -> (i32, i32) {
    %c0_i32 = arith.constant 0 : i32
    %c0_i32_0 = arith.constant 0 : i32
    %c0_i32_1 = arith.constant 0 : i32
    return %c0_i32, %c0_i32_0 : i32, i32
  }
  func.func @transform_3(%arg0: i32, %arg1: i32) -> (i32, i32) {
    %c0_i32 = arith.constant 0 : i32
    %c0_i32_0 = arith.constant 0 : i32
    return %c0_i32, %arg0 : i32, i32
  }
  func.func @transform_4(%arg0: i32, %arg1: i32) -> (i32, i32) {
    %c0_i32 = arith.constant 0 : i32
    %c0_i32_0 = arith.constant 0 : i32
    return %c0_i32, %arg0 : i32, i32
  }
  func.func @transform_5(%arg0: i32, %arg1: i32) -> (i32, i32) {
    %c0_i32 = arith.constant 0 : i32
    return %arg1, %arg0 : i32, i32
  }
}

</mosaic_0001>

<llo_original>
// kernel: tpu_custom_call.1
$region0: #{tpu_custom_call.1}
  #allocation0 [shape = 'u32[]', space=smem, size = 0x4, offset = 0x4, fixed_abs, tag = 'smem constant byte address 0x4 - core index']
  #allocation1 [shape = 'u32[72,128]{1,0:T(1,128)}', space=vmem, size = 0x9000, scoped, tag = 'internal scratch']
  %s0 = inlined_call_operand.hbm [shape: f32[16,32], index: 0, kind: input, shape index: {}]
  %s1 = inlined_call_operand.hbm [shape: f32[1,32], index: 1, kind: input, shape index: {}]
  %s2 = inlined_call_operand.vmem [shape: f32[1,32], index: 2, kind: input, shape index: {}]
  %s3 = inlined_call_operand.hbm [shape: bf16[32,96], index: 3, kind: input, shape index: {}]
  %s4 = inlined_call_operand.vmem [shape: f32[1,96], index: 4, kind: input, shape index: {}]
  %s5 = inlined_call_operand.hbm [shape: bf16[16,96], index: 5, kind: output, shape index: {}]
  %s6 = sld [smem:[#allocation0]]
  $region42: #{tpu_custom_call.1} parent=0
    _
  %s8 = ssub.s32 1, %s6
  %s9 = scalar_select 0, %s8, %s6
  $region1: #{tpu_custom_call.1} parent=0
    #allocation2 [shape = 'u8[8192]{0}', space=vmem, size = 0x2000, scoped, tag = 'input window, operand 0, single buffered']
    #allocation3 [shape = 's32[1]{0}', space=sflag, size = 0x4, scoped, tag = 'scoped memory for tpu_custom_call.1']
    #allocation4 [shape = 's32[1]{0}', space=sflag, size = 0x4, scoped, tag = 'scoped memory for tpu_custom_call.1']
    #allocation5 [shape = 'u8[512]{0}', space=vmem, size = 0x400, scoped, tag = 'input window, operand 1, single buffered']
    #allocation6 [shape = 's32[1]{0}', space=sflag, size = 0x4, scoped, tag = 'scoped memory for tpu_custom_call.1']
    #allocation7 [shape = 'u8[8192]{0}', space=vmem, size = 0x2000, scoped, tag = 'input window, operand 3, single buffered']
    #allocation8 [shape = 'u8[4096]{0}', space=vmem, size = 0x1000, scoped, tag = 'output window, operand 0, single buffered']
    %10 = vsyncpa [#allocation3], 0
    %11 = vsyncpa [#allocation6], 0
    %12 = vsyncpa [#allocation4], 0
    // Predicated region
    $region2: #{tpu_custom_call.1} parent=1 // pred_check
      _
    $region3: #{tpu_custom_call.1} parent=1 // pred_check_branch
      %14 = sbr.rel (0) target = $region5
    $region4: #{tpu_custom_call.1} parent=1 // pred_region
      %16 = vsyncadd [#allocation3], 0
      %s17 = sshll.u32 %s0, 4
      %s18 = int_to_ptr.hbm [resolvable:$true] %s17
      %s19 = sshll.u32 [#allocation2], 4
      %s20 = int_to_ptr.vmem [resolvable:$true] %s19
      %25 = dma.hbm_to_vmem [thread:$0]  %s18, 256, %s20, [#allocation3], 128, 128, 8
    $region5: #{tpu_custom_call.1} parent=1 // pred_fallthru
      _
    // Predicated region
    $region6: #{tpu_custom_call.1} parent=1 // pred_check
      _
    $region7: #{tpu_custom_call.1} parent=1 // pred_check_branch
      %27 = sbr.rel (0) target = $region9
    $region8: #{tpu_custom_call.1} parent=1 // pred_region
      %29 = vsyncadd [#allocation6], 0
      %s31 = sshll.u32 %s1, 4
      %s32 = int_to_ptr.hbm [resolvable:$true] %s31
      %s33 = sshll.u32 [#allocation5], 4
      %s34 = int_to_ptr.vmem [resolvable:$true] %s33
      %36 = dma.hbm_to_vmem [thread:$0]  %s32, 16, %s34, [#allocation6]
    $region9: #{tpu_custom_call.1} parent=1 // pred_fallthru
      _
    // Predicated region
    $region10: #{tpu_custom_call.1} parent=1 // pred_check
      _
    $region11: #{tpu_custom_call.1} parent=1 // pred_check_branch
      %38 = sbr.rel (0) target = $region13
    $region12: #{tpu_custom_call.1} parent=1 // pred_region
      _
    $region13: #{tpu_custom_call.1} parent=1 // pred_fallthru
      _
    // Predicated region
    $region14: #{tpu_custom_call.1} parent=1 // pred_check
      _
    $region15: #{tpu_custom_call.1} parent=1 // pred_check_branch
      %40 = sbr.rel (0) target = $region17
    $region16: #{tpu_custom_call.1} parent=1 // pred_region
      %42 = vsyncadd [#allocation6], 0
      %s43 = sshll.u32 %s3, 4
      %s44 = int_to_ptr.hbm [resolvable:$true] %s43
      %s45 = sshll.u32 [#allocation7], 4
      %s46 = int_to_ptr.vmem [resolvable:$true] %s45
      %51 = dma.hbm_to_vmem [thread:$0]  %s44, 256, %s46, [#allocation6], 64, 64, 4
    $region17: #{tpu_custom_call.1} parent=1 // pred_fallthru
      _
    // Predicated region
    $region18: #{tpu_custom_call.1} parent=1 // pred_check
      _
    $region19: #{tpu_custom_call.1} parent=1 // pred_check_branch
      %53 = sbr.rel (0) target = $region21
    $region20: #{tpu_custom_call.1} parent=1 // pred_region
      _
    $region21: #{tpu_custom_call.1} parent=1 // pred_fallthru
      _
    // Predicated region
    $region22: #{tpu_custom_call.1} parent=1 // pred_check
      _
    $region23: #{tpu_custom_call.1} parent=1 // pred_check_branch
      %55 = sbr.rel (0) target = $region25
    $region24: #{tpu_custom_call.1} parent=1 // pred_region
      %57 = dma.done [#allocation3], 256
    $region25: #{tpu_custom_call.1} parent=1 // pred_fallthru
      _
    // Predicated region
    $region26: #{tpu_custom_call.1} parent=1 // pred_check
      _
    $region27: #{tpu_custom_call.1} parent=1 // pred_check_branch
      %59 = sbr.rel (0) target = $region29
    $region28: #{tpu_custom_call.1} parent=1 // pred_region
      %61 = dma.done [#allocation6], 16
    $region29: #{tpu_custom_call.1} parent=1 // pred_fallthru
      _
    // Predicated region
    $region30: #{tpu_custom_call.1} parent=1 // pred_check
      _
    $region31: #{tpu_custom_call.1} parent=1 // pred_check_branch
      %63 = sbr.rel (0) target = $region33
    $region32: #{tpu_custom_call.1} parent=1 // pred_region
      %65 = dma.done [#allocation6], 256
    $region33: #{tpu_custom_call.1} parent=1 // pred_fallthru
      _
    %v67 = vld [vmem:[#allocation2] sm:$0xff]
    %v68 = vld [vmem:[#allocation2 + $0x8] sm:$0xff]
    %vm69 = vcmask 261120
    %v70 = vsel %vm69, %v67, 0.0
    %71 = vadd.xlane.f32.xlu0 %v70
    %v72 = vpop.xlane.xlu0 %71
    %v73 = vsel %vm69, %v68, 0.0
    %74 = vadd.xlane.f32.xlu0 %v73
    %v75 = vpop.xlane.xlu0 %74
    %v76 = vrcp.pop 32.0
    %v77 = vmul.f32 32.0, %v76
    %v78 = vsub.f32 1.0, %v77
    %v79 = vmul.f32 %v76, %v78
    %v80 = vadd.f32 %v76, %v79
    %vm81 = vweird.f32 %v76
    %v82 = vsel %vm81, %v76, %v80
    %v83 = vmul.f32 %v72, %v82
    %v84 = vmul.f32 %v75, %v82
    %v85 = vsub.f32 %v67, %v83
    %v86 = vsub.f32 %v68, %v84
    %v87 = vmul.f32 %v85, %v85
    %v88 = vmul.f32 %v86, %v86
    %v89 = vsel %vm69, %v87, 0.0
    %90 = vadd.xlane.f32.xlu0 %v89
    %v91 = vpop.xlane.xlu0 %90
    %v92 = vsel %vm69, %v88, 0.0
    %93 = vadd.xlane.f32.xlu0 %v92
    %v94 = vpop.xlane.xlu0 %93
    %v95 = vmul.f32 %v91, %v82
    %v96 = vmul.f32 %v94, %v82
    %v97 = vadd.f32 %v95, 1e-05
    %v98 = vadd.f32 %v96, 1e-05
    %v99 = vrsqrt.pop %v97
    %v100 = vmul.f32 %v99, %v97
    %v101 = vmul.f32 %v100, %v99
    %v102 = vmul.f32 0.5, %v101
    %v103 = vsub.f32 1.5, %v102
    %v104 = vmul.f32 %v99, %v103
    %vm105 = vweird.f32 %v97
    %vm106 = vweird.f32 %v99
    %vm107 = vmor %vm105, %vm106
    %v108 = vsel %vm107, %v99, %v104
    %v109 = vrsqrt.pop %v98
    %v110 = vmul.f32 %v109, %v98
    %v111 = vmul.f32 %v110, %v109
    %v112 = vmul.f32 0.5, %v111
    %v113 = vsub.f32 1.5, %v112
    %v114 = vmul.f32 %v109, %v113
    %vm115 = vweird.f32 %v98
    %vm116 = vweird.f32 %v109
    %vm117 = vmor %vm115, %vm116
    %v118 = vsel %vm117, %v109, %v114
    %v119 = vmul.f32 %v85, %v108
    %v120 = vmul.f32 %v86, %v118
    %v121 = vld [vmem:[#allocation5] sm:$0x1]
    %v123 = vperm.slane %v121, 0
    %v125 = vmul.f32 %v119, %v123
    %v126 = vmul.f32 %v120, %v123
    %v127 = vld [vmem:[%s2] sm:$0x1]
    %v129 = vperm.slane %v127, 0
    %v131 = vadd.f32 %v125, %v129
    %v132 = vadd.f32 %v126, %v129
    %v133 = vpack.c.bf16 %v132, %v131
    %v134 = vld [vmem:[#allocation7] sm:$0xf]
    %v135 = vld [vmem:[#allocation7 + $0x4] sm:$0xf]
    %v136 = vld [vmem:[#allocation7 + $0x8] sm:$0xf]
    %v137 = vld [vmem:[#allocation7 + $0xc] sm:$0xf]
    %v138 = vld [vmem:[%s4] sm:$0x1]
    %v140 = vperm.slane %v138, 0
    %v146 = vunpack.c.l.b16 %v134
    %v147 = vunpack.c.l.b16 %v135
    %v148 = vunpack.c.l.b16 %v136
    %v149 = vunpack.c.l.b16 %v137
    %v150 = vpack.c.b16 %v147, %v146
    %v151 = vpack.c.b16 %v149, %v148
    %v155 = vsel %vm69, %v133, 0
    %157 = vmatpush.bf16.msra.mxu0 0
    %158 = vmatpush.bf16.msra.mxu0 0
    %159 = vmatpush.bf16.msra.mxu0 0
    %160 = vmatpush.bf16.msra.mxu0 0
    %161 = vmatpush.bf16.msra.mxu0 0
    %162 = vmatpush.bf16.msra.mxu0 0
    %163 = vmatpush.bf16.msra.mxu0 %v151
    %164 = vmatpush.bf16.msra.mxu0 %v150
    %165 = vmatmul.bf16.gmra.mxu0 %v155
    %v166 = vpop.f32.mrf.mxu0
    %v167 = vadd.f32 %v140, %v166
    %v168 = vpop.f32.mrf.mxu0
    %v169 = vadd.f32 %v140, %v168
    %170 = vdwg.mxu0
    %v171 = vpack.c.bf16 %v167, %v167
    %v172 = vpack.c.bf16 %v169, %v169
    %vm173 = vcmask 781312
    %174 = vst.msk [vmem:[#allocation8] sm:$0xf] %vm173, %v171
    %175 = vst.msk [vmem:[#allocation8 + $0x4] sm:$0xf] %vm173, %v172
    // Predicated region
    $region34: #{tpu_custom_call.1} parent=1 // pred_check
      _
    $region35: #{tpu_custom_call.1} parent=1 // pred_check_branch
      %177 = sbr.rel (0) target = $region37
    $region36: #{tpu_custom_call.1} parent=1 // pred_region
      %179 = vsyncadd [#allocation4], 0
      %s180 = sshll.u32 [#allocation8], 4
      %s181 = int_to_ptr.vmem [resolvable:$true] %s180
      %s182 = sshll.u32 %s5, 4
      %s183 = int_to_ptr.hbm [resolvable:$true] %s182
      %188 = dma.vmem_to_hbm [thread:$0]  %s181, 128, %s183, [#allocation4], 64, 64, 4
    $region37: #{tpu_custom_call.1} parent=1 // pred_fallthru
      _
    // Predicated region
    $region38: #{tpu_custom_call.1} parent=1 // pred_check
      _
    $region39: #{tpu_custom_call.1} parent=1 // pred_check_branch
      %190 = sbr.rel (0) target = $region41
    $region40: #{tpu_custom_call.1} parent=1 // pred_region
      %192 = dma.done [#allocation4], 128
    $region41: #{tpu_custom_call.1} parent=1 // pred_fallthru
      _
    %193 = vsyncpa [#allocation3], 1
    %194 = vsyncpa [#allocation6], 1
    %195 = vsyncpa [#allocation4], 1

</llo_original>
